<compile_context>
chip_gen: v7x
topology: tpu7x:2x2x1
jax: 0.10.0
libtpu: 0.0.40
codegen_flags: <defaults>
</compile_context>

<pallas_src>
import jax
import jax.numpy as jnp
from jax.experimental import pallas as pl
from jax.experimental.pallas import tpu as pltpu


HIDDEN = 256     # multiple of 128 -> MXU friendly on all generations
SUBLANE = 16     # batch-tile granularity: satisfies f32 (8) and bf16 (16) packing


def _round_up(x, m):
    return ((x + m - 1) // m) * m


def polnet_kernel(x_ref, w1_ref, b1_ref, w2_ref, b2_ref, w3_ref, b3_ref,
                  wh_ref, bh_ref, lo_ref, hi_ref, out_ref):
    bf16 = jnp.bfloat16
    # hidden layer 1  (bf16 operands, f32 MXU accumulation)
    h = jnp.dot(x_ref[...].astype(bf16), w1_ref[...],
                preferred_element_type=jnp.float32)
    h = jnp.maximum(h + b1_ref[...], 0.0)
    # hidden layer 2
    h = jnp.dot(h.astype(bf16), w2_ref[...],
                preferred_element_type=jnp.float32)
    h = jnp.maximum(h + b2_ref[...], 0.0)
    # hidden layer 3
    h = jnp.dot(h.astype(bf16), w3_ref[...],
                preferred_element_type=jnp.float32)
    h = jnp.maximum(h + b3_ref[...], 0.0)
    # fused heads: one matmul produces [mean | logstd | zero-pad]; the logstd
    # clip is expressed as per-column lo/hi bounds (+-inf on mean/pad columns),
    # so it is just a fused max/min instead of iota + compares + select.
    head = jnp.dot(h.astype(bf16), wh_ref[...],
                   preferred_element_type=jnp.float32) + bh_ref[...]
    head = jnp.minimum(jnp.maximum(head, lo_ref[...]), hi_ref[...])
    out_ref[...] = head.astype(out_ref.dtype)   # bf16 writeback (half the HBM traffic)


def prepare_polnet_params(params, actionsize):
    """Convert PyTorch-layout-equivalent params into kernel-ready params:
       bf16 [in,out] weights, fused + lane-padded head, f32 biases, clip rows."""
    (w1, b1, w2, b2, w3, b3, wm, bm, ws, bs) = params
    head_w = jnp.concatenate([wm, ws], axis=1)          # (H, 2*A)
    head_b = jnp.concatenate([bm, bs], axis=1)          # (1, 2*A)
    head_pad = max(128, _round_up(2 * actionsize, 128))
    pad_cols = head_pad - 2 * actionsize
    if pad_cols:
        head_w = jnp.pad(head_w, ((0, 0), (0, pad_cols)))
        head_b = jnp.pad(head_b, ((0, 0), (0, pad_cols)))
    # per-column clip bounds: finite only on the logstd columns
    lo = jnp.full((1, head_pad), -jnp.inf, jnp.float32)
    hi = jnp.full((1, head_pad), jnp.inf, jnp.float32)
    lo = lo.at[:, actionsize:2 * actionsize].set(-20.0)
    hi = hi.at[:, actionsize:2 * actionsize].set(2.0)
    bf16 = jnp.bfloat16
    return (w1.astype(bf16), b1.astype(jnp.float32),
            w2.astype(bf16), b2.astype(jnp.float32),
            w3.astype(bf16), b3.astype(jnp.float32),
            head_w.astype(bf16), head_b.astype(jnp.float32),
            lo, hi)


def polnet_forward(x, kparams, actionsize, *, batch_tile=4096):
    """Run the fused Polnet forward.  Returns (mean, logstd), both f32."""
    (w1, b1, w2, b2, w3, b3, wh, bh, lo, hi) = kparams
    batch, insize = x.shape
    hidden = w1.shape[1]
    head_pad = wh.shape[1]

    # Tile selection:
    #  * cap at batch_tile (big tiles amortise the ~0.35 us per-step overhead)
    #  * aim for >= 2 grid steps so ("parallel",) shards across v7x's 2 TCs
    #  * multiple of SUBLANE=16 (covers f32 input and bf16 output packing)
    padded16 = _round_up(batch, SUBLANE)
    tb = min(batch_tile, _round_up(pl.cdiv(padded16, 2), SUBLANE))
    tb = max(tb, SUBLANE)
    padded_batch = _round_up(batch, tb)
    if padded_batch != batch:
        x = jnp.pad(x, ((0, padded_batch - batch), (0, 0)))
    grid = (padded_batch // tb,)

    const = lambda i: (0, 0)  # residents: DMA'd once, live across grid steps

    out = pl.pallas_call(
        polnet_kernel,
        out_shape=jax.ShapeDtypeStruct((padded_batch, head_pad), jnp.bfloat16),
        grid_spec=pltpu.PrefetchScalarGridSpec(
            num_scalar_prefetch=0,
            grid=grid,
            in_specs=[
                pl.BlockSpec((tb, insize), lambda i: (i, 0)),      # x tile
                pl.BlockSpec((insize, hidden), const),             # W1
                pl.BlockSpec((1, hidden), const),                  # b1
                pl.BlockSpec((hidden, hidden), const),             # W2
                pl.BlockSpec((1, hidden), const),                  # b2
                pl.BlockSpec((hidden, hidden), const),             # W3
                pl.BlockSpec((1, hidden), const),                  # b3
                pl.BlockSpec((hidden, head_pad), const),           # fused head W
                pl.BlockSpec((1, head_pad), const),                # fused head b
                pl.BlockSpec((1, head_pad), const),                # clip lo
                pl.BlockSpec((1, head_pad), const),                # clip hi
            ],
            out_specs=pl.BlockSpec((tb, head_pad), lambda i: (i, 0)),
        ),
        compiler_params=pltpu.CompilerParams(
            dimension_semantics=("parallel",),   # megacore sharding on v7x
        ),
    )(x, w1, b1, w2, b2, w3, b3, wh, bh, lo, hi)

    mean = out[:batch, :actionsize].astype(jnp.float32)
    logstd = out[:batch, actionsize:2 * actionsize].astype(jnp.float32)
    return mean, logstd


def init_polnet_params(key, inputsize, actionsize, hidden=HIDDEN):
    """Deterministic f32 init mirroring the PyTorch module:
       - l1/l2/l3: default nn.Linear init = U(-1/sqrt(fan_in), 1/sqrt(fan_in))
       - mean/logstd heads: U(-0.003, 0.003)
       Weights stored [in, out]; biases stored [1, out]."""
    ks = jax.random.split(key, 10)

    def lin(kw, kb, fan_in, fan_out, bound):
        w = jax.random.uniform(kw, (fan_in, fan_out), jnp.float32, -bound, bound)
        b = jax.random.uniform(kb, (1, fan_out), jnp.float32, -bound, bound)
        return w, b

    w1, b1 = lin(ks[0], ks[1], inputsize, hidden, 1.0 / (inputsize ** 0.5))
    w2, b2 = lin(ks[2], ks[3], hidden, hidden, 1.0 / (hidden ** 0.5))
    w3, b3 = lin(ks[4], ks[5], hidden, hidden, 1.0 / (hidden ** 0.5))
    wm, bm = lin(ks[6], ks[7], hidden, actionsize, 0.003)
    ws, bs = lin(ks[8], ks[9], hidden, actionsize, 0.003)
    return (w1, b1, w2, b2, w3, b3, wm, bm, ws, bs)


def polnet_reference_f32(x, params):
    """Pure-f32 pure-JAX reference (PyTorch semantics)."""
    (w1, b1, w2, b2, w3, b3, wm, bm, ws, bs) = params
    h = jnp.maximum(x @ w1 + b1, 0.0)
    h = jnp.maximum(h @ w2 + b2, 0.0)
    h = jnp.maximum(h @ w3 + b3, 0.0)
    mean = h @ wm + bm
    logstd = jnp.clip(h @ ws + bs, -20.0, 2.0)
    return mean, logstd


def polnet_reference_bf16(x, kparams, actionsize):
    """Pure-JAX reference using the exact kernel numerics (bf16 weights,
       f32 accumulation, bf16 output) for a tight correctness check."""
    (w1, b1, w2, b2, w3, b3, wh, bh, lo, hi) = kparams
    bf16 = jnp.bfloat16
    h = jnp.maximum(jnp.dot(x.astype(bf16), w1,
                            preferred_element_type=jnp.float32) + b1, 0.0)
    h = jnp.maximum(jnp.dot(h.astype(bf16), w2,
                            preferred_element_type=jnp.float32) + b2, 0.0)
    h = jnp.maximum(jnp.dot(h.astype(bf16), w3,
                            preferred_element_type=jnp.float32) + b3, 0.0)
    head = jnp.dot(h.astype(bf16), wh,
                   preferred_element_type=jnp.float32) + bh
    head = jnp.minimum(jnp.maximum(head, lo), hi)
    head = head.astype(bf16).astype(jnp.float32)
    mean = head[:, :actionsize]
    logstd = head[:, actionsize:2 * actionsize]
    return mean, logstd


if __name__ == "__main__":
    key = jax.random.PRNGKey(0)
    k_param, k_x = jax.random.split(key)

    batch = 8
    inputsize = 32      # state dimension
    actionsize = 8      # action dimension

    params = init_polnet_params(k_param, inputsize, actionsize)
    kparams = prepare_polnet_params(params, actionsize)
    x = jax.random.normal(k_x, (batch, inputsize), dtype=jnp.float32)

    mean, logstd = polnet_forward(x, kparams, actionsize)
    mean, logstd = jax.block_until_ready((mean, logstd))

    assert mean.shape == (batch, actionsize)
    assert logstd.shape == (batch, actionsize)

    # Tight check against a pure-JAX implementation with identical numerics.
    mean_bref, logstd_bref = polnet_reference_bf16(x, kparams, actionsize)
    assert jnp.allclose(mean, mean_bref, atol=1e-3, rtol=1e-3)
    assert jnp.allclose(logstd, logstd_bref, atol=1e-3, rtol=1e-3)

    # Loose check against the f32 PyTorch-semantics reference (bf16 weight +
    # bf16 output quantization error only; tolerance loose on purpose).
    mean_fref, logstd_fref = polnet_reference_f32(x, params)
    assert jnp.allclose(mean, mean_fref, atol=3e-3)
    assert jnp.allclose(logstd, logstd_fref, atol=3e-3)
    assert bool(jnp.all(logstd <= 2.0)) and bool(jnp.all(logstd >= -20.0))

    # TODO(synk): getactionentropy (Normal.rsample / tanh squash / log_prob)
    # is a sampling-time utility, not part of the forward pass; left in JAX.
    print("KERNEL_OK")
</pallas_src>

<mosaic_0001>
module attributes {stable_mosaic.version = 11 : i64} {
  func.func @polnet_kernel(%arg0: i32, %arg1: memref<16x32xf32, #tpu.memory_space<vmem>>, %arg2: memref<32x256xbf16, #tpu.memory_space<vmem>>, %arg3: memref<1x256xf32, #tpu.memory_space<vmem>>, %arg4: memref<256x256xbf16, #tpu.memory_space<vmem>>, %arg5: memref<1x256xf32, #tpu.memory_space<vmem>>, %arg6: memref<256x256xbf16, #tpu.memory_space<vmem>>, %arg7: memref<1x256xf32, #tpu.memory_space<vmem>>, %arg8: memref<256x128xbf16, #tpu.memory_space<vmem>>, %arg9: memref<1x128xf32, #tpu.memory_space<vmem>>, %arg10: memref<1x128xf32, #tpu.memory_space<vmem>>, %arg11: memref<1x128xf32, #tpu.memory_space<vmem>>, %arg12: memref<16x128xbf16, #tpu.memory_space<vmem>>) attributes {dimension_semantics = [#tpu.dimension_semantics<parallel>], iteration_bounds = array<i64: 1>, scalar_prefetch = 0 : i64, scratch_operands = 0 : i64, tpu.core_type = #tpu.core_type<tc>, window_params = [{transform_indices = @transform_0, window_bounds = array<i64: 16, 32>}, {pipeline_mode = #tpu.pipeline_mode<synchronous>, transform_indices = @transform_1, window_bounds = array<i64: 32, 256>}, {pipeline_mode = #tpu.pipeline_mode<synchronous>, transform_indices = @transform_2, window_bounds = array<i64: 1, 256>}, {pipeline_mode = #tpu.pipeline_mode<synchronous>, transform_indices = @transform_3, window_bounds = array<i64: 256, 256>}, {pipeline_mode = #tpu.pipeline_mode<synchronous>, transform_indices = @transform_4, window_bounds = array<i64: 1, 256>}, {pipeline_mode = #tpu.pipeline_mode<synchronous>, transform_indices = @transform_5, window_bounds = array<i64: 256, 256>}, {pipeline_mode = #tpu.pipeline_mode<synchronous>, transform_indices = @transform_6, window_bounds = array<i64: 1, 256>}, {pipeline_mode = #tpu.pipeline_mode<synchronous>, transform_indices = @transform_7, window_bounds = array<i64: 256, 128>}, {pipeline_mode = #tpu.pipeline_mode<synchronous>, transform_indices = @transform_8, window_bounds = array<i64: 1, 128>}, {pipeline_mode = #tpu.pipeline_mode<synchronous>, transform_indices = @transform_9, window_bounds = array<i64: 1, 128>}, {pipeline_mode = #tpu.pipeline_mode<synchronous>, transform_indices = @transform_10, window_bounds = array<i64: 1, 128>}, {transform_indices = @transform_11, window_bounds = array<i64: 16, 128>}]} {
    %c0 = arith.constant 0 : index
    %c0_0 = arith.constant 0 : index
    %0 = vector.load %arg1[%c0, %c0_0] : memref<16x32xf32, #tpu.memory_space<vmem>>, vector<16x32xf32>
    %1 = arith.truncf %0 : vector<16x32xf32> to vector<16x32xbf16>
    %c0_1 = arith.constant 0 : index
    %c0_2 = arith.constant 0 : index
    %2 = vector.load %arg2[%c0_1, %c0_2] : memref<32x256xbf16, #tpu.memory_space<vmem>>, vector<32x256xbf16>
    %cst = arith.constant dense<0.000000e+00> : vector<16x256xf32>
    %3 = tpu.matmul %1, %2, %cst {dimension_numbers = #tpu.dot_dimension_numbers<[1], [0], [0], [1], [0, 0, 1, 1], [], []>} : vector<16x32xbf16>, vector<32x256xbf16>, vector<16x256xf32> -> vector<16x256xf32>
    %c0_3 = arith.constant 0 : index
    %c0_4 = arith.constant 0 : index
    %4 = vector.load %arg3[%c0_3, %c0_4] : memref<1x256xf32, #tpu.memory_space<vmem>>, vector<1x256xf32>
    %5 = vector.broadcast %4 : vector<1x256xf32> to vector<16x256xf32>
    %6 = arith.addf %3, %5 : vector<16x256xf32>
    %cst_5 = arith.constant 0.000000e+00 : f32
    %7 = vector.broadcast %cst_5 : f32 to vector<16x256xf32>
    %8 = arith.maximumf %6, %7 : vector<16x256xf32>
    %9 = arith.truncf %8 : vector<16x256xf32> to vector<16x256xbf16>
    %c0_6 = arith.constant 0 : index
    %c0_7 = arith.constant 0 : index
    %10 = vector.load %arg4[%c0_6, %c0_7] : memref<256x256xbf16, #tpu.memory_space<vmem>>, vector<256x256xbf16>
    %cst_8 = arith.constant dense<0.000000e+00> : vector<16x256xf32>
    %11 = tpu.matmul %9, %10, %cst_8 {dimension_numbers = #tpu.dot_dimension_numbers<[1], [0], [0], [1], [0, 0, 1, 1], [], []>} : vector<16x256xbf16>, vector<256x256xbf16>, vector<16x256xf32> -> vector<16x256xf32>
    %c0_9 = arith.constant 0 : index
    %c0_10 = arith.constant 0 : index
    %12 = vector.load %arg5[%c0_9, %c0_10] : memref<1x256xf32, #tpu.memory_space<vmem>>, vector<1x256xf32>
    %13 = vector.broadcast %12 : vector<1x256xf32> to vector<16x256xf32>
    %14 = arith.addf %11, %13 : vector<16x256xf32>
    %cst_11 = arith.constant 0.000000e+00 : f32
    %15 = vector.broadcast %cst_11 : f32 to vector<16x256xf32>
    %16 = arith.maximumf %14, %15 : vector<16x256xf32>
    %17 = arith.truncf %16 : vector<16x256xf32> to vector<16x256xbf16>
    %c0_12 = arith.constant 0 : index
    %c0_13 = arith.constant 0 : index
    %18 = vector.load %arg6[%c0_12, %c0_13] : memref<256x256xbf16, #tpu.memory_space<vmem>>, vector<256x256xbf16>
    %cst_14 = arith.constant dense<0.000000e+00> : vector<16x256xf32>
    %19 = tpu.matmul %17, %18, %cst_14 {dimension_numbers = #tpu.dot_dimension_numbers<[1], [0], [0], [1], [0, 0, 1, 1], [], []>} : vector<16x256xbf16>, vector<256x256xbf16>, vector<16x256xf32> -> vector<16x256xf32>
    %c0_15 = arith.constant 0 : index
    %c0_16 = arith.constant 0 : index
    %20 = vector.load %arg7[%c0_15, %c0_16] : memref<1x256xf32, #tpu.memory_space<vmem>>, vector<1x256xf32>
    %21 = vector.broadcast %20 : vector<1x256xf32> to vector<16x256xf32>
    %22 = arith.addf %19, %21 : vector<16x256xf32>
    %cst_17 = arith.constant 0.000000e+00 : f32
    %23 = vector.broadcast %cst_17 : f32 to vector<16x256xf32>
    %24 = arith.maximumf %22, %23 : vector<16x256xf32>
    %25 = arith.truncf %24 : vector<16x256xf32> to vector<16x256xbf16>
    %c0_18 = arith.constant 0 : index
    %c0_19 = arith.constant 0 : index
    %26 = vector.load %arg8[%c0_18, %c0_19] : memref<256x128xbf16, #tpu.memory_space<vmem>>, vector<256x128xbf16>
    %cst_20 = arith.constant dense<0.000000e+00> : vector<16x128xf32>
    %27 = tpu.matmul %25, %26, %cst_20 {dimension_numbers = #tpu.dot_dimension_numbers<[1], [0], [0], [1], [0, 0, 1, 1], [], []>} : vector<16x256xbf16>, vector<256x128xbf16>, vector<16x128xf32> -> vector<16x128xf32>
    %c0_21 = arith.constant 0 : index
    %c0_22 = arith.constant 0 : index
    %28 = vector.load %arg9[%c0_21, %c0_22] : memref<1x128xf32, #tpu.memory_space<vmem>>, vector<1x128xf32>
    %29 = vector.broadcast %28 : vector<1x128xf32> to vector<16x128xf32>
    %30 = arith.addf %27, %29 : vector<16x128xf32>
    %c0_23 = arith.constant 0 : index
    %c0_24 = arith.constant 0 : index
    %31 = vector.load %arg10[%c0_23, %c0_24] : memref<1x128xf32, #tpu.memory_space<vmem>>, vector<1x128xf32>
    %32 = vector.broadcast %31 : vector<1x128xf32> to vector<16x128xf32>
    %33 = arith.maximumf %30, %32 : vector<16x128xf32>
    %c0_25 = arith.constant 0 : index
    %c0_26 = arith.constant 0 : index
    %34 = vector.load %arg11[%c0_25, %c0_26] : memref<1x128xf32, #tpu.memory_space<vmem>>, vector<1x128xf32>
    %35 = vector.broadcast %34 : vector<1x128xf32> to vector<16x128xf32>
    %36 = arith.minimumf %33, %35 : vector<16x128xf32>
    %37 = arith.truncf %36 : vector<16x128xf32> to vector<16x128xbf16>
    %c0_27 = arith.constant 0 : index
    %c0_28 = arith.constant 0 : index
    %38 = vector.load %arg12[%c0_27, %c0_28] : memref<16x128xbf16, #tpu.memory_space<vmem>>, vector<16x128xbf16>
    tpu.vector_store %arg12[%c0_27, %c0_28], %37 {strides = array<i32>} : memref<16x128xbf16, #tpu.memory_space<vmem>>, vector<16x128xbf16>,
    return
  }
  func.func @transform_0(%arg0: i32) -> (i32, i32) {
    %c0_i32 = arith.constant 0 : i32
    %c0_i32_0 = arith.constant 0 : i32
    return %arg0, %c0_i32 : i32, i32
  }
  func.func @transform_1(%arg0: i32) -> (i32, i32) {
    %c0_i32 = arith.constant 0 : i32
    %c0_i32_0 = arith.constant 0 : i32
    %c0_i32_1 = arith.constant 0 : i32
    return %c0_i32, %c0_i32_0 : i32, i32
  }
  func.func @transform_2(%arg0: i32) -> (i32, i32) {
    %c0_i32 = arith.constant 0 : i32
    %c0_i32_0 = arith.constant 0 : i32
    %c0_i32_1 = arith.constant 0 : i32
    return %c0_i32, %c0_i32_0 : i32, i32
  }
  func.func @transform_3(%arg0: i32) -> (i32, i32) {
    %c0_i32 = arith.constant 0 : i32
    %c0_i32_0 = arith.constant 0 : i32
    %c0_i32_1 = arith.constant 0 : i32
    return %c0_i32, %c0_i32_0 : i32, i32
  }
  func.func @transform_4(%arg0: i32) -> (i32, i32) {
    %c0_i32 = arith.constant 0 : i32
    %c0_i32_0 = arith.constant 0 : i32
    %c0_i32_1 = arith.constant 0 : i32
    return %c0_i32, %c0_i32_0 : i32, i32
  }
  func.func @transform_5(%arg0: i32) -> (i32, i32) {
    %c0_i32 = arith.constant 0 : i32
    %c0_i32_0 = arith.constant 0 : i32
    %c0_i32_1 = arith.constant 0 : i32
    return %c0_i32, %c0_i32_0 : i32, i32
  }
  func.func @transform_6(%arg0: i32) -> (i32, i32) {
    %c0_i32 = arith.constant 0 : i32
    %c0_i32_0 = arith.constant 0 : i32
    %c0_i32_1 = arith.constant 0 : i32
    return %c0_i32, %c0_i32_0 : i32, i32
  }
  func.func @transform_7(%arg0: i32) -> (i32, i32) {
    %c0_i32 = arith.constant 0 : i32
    %c0_i32_0 = arith.constant 0 : i32
    %c0_i32_1 = arith.constant 0 : i32
    return %c0_i32, %c0_i32_0 : i32, i32
  }
  func.func @transform_8(%arg0: i32) -> (i32, i32) {
    %c0_i32 = arith.constant 0 : i32
    %c0_i32_0 = arith.constant 0 : i32
    %c0_i32_1 = arith.constant 0 : i32
    return %c0_i32, %c0_i32_0 : i32, i32
  }
  func.func @transform_9(%arg0: i32) -> (i32, i32) {
    %c0_i32 = arith.constant 0 : i32
    %c0_i32_0 = arith.constant 0 : i32
    %c0_i32_1 = arith.constant 0 : i32
    return %c0_i32, %c0_i32_0 : i32, i32
  }
  func.func @transform_10(%arg0: i32) -> (i32, i32) {
    %c0_i32 = arith.constant 0 : i32
    %c0_i32_0 = arith.constant 0 : i32
    %c0_i32_1 = arith.constant 0 : i32
    return %c0_i32, %c0_i32_0 : i32, i32
  }
  func.func @transform_11(%arg0: i32) -> (i32, i32) {
    %c0_i32 = arith.constant 0 : i32
    %c0_i32_0 = arith.constant 0 : i32
    return %arg0, %c0_i32 : i32, i32
  }
}

</mosaic_0001>

<llo_original>
// kernel: tpu_custom_call.1
$region0: #{tpu_custom_call.1}
  #allocation0 [shape = 'u32[]', space=smem, size = 0x4, offset = 0x4, fixed_abs, tag = 'smem constant byte address 0x4 - core index']
  #allocation1 [shape = 'u32[144,128]{1,0:T(1,128)}', space=vmem, size = 0x12000, scoped, tag = 'internal scratch']
  %s0 = inlined_call_operand.hbm [shape: f32[16,32], index: 0, kind: input, shape index: {}]
  %s1 = inlined_call_operand.hbm [shape: bf16[32,256], index: 1, kind: input, shape index: {}]
  %s2 = inlined_call_operand.vmem [shape: f32[1,256], index: 2, kind: input, shape index: {}]
  %s3 = inlined_call_operand.hbm [shape: bf16[256,256], index: 3, kind: input, shape index: {}]
  %s4 = inlined_call_operand.vmem [shape: f32[1,256], index: 4, kind: input, shape index: {}]
  %s5 = inlined_call_operand.hbm [shape: bf16[256,256], index: 5, kind: input, shape index: {}]
  %s6 = inlined_call_operand.vmem [shape: f32[1,256], index: 6, kind: input, shape index: {}]
  %s7 = inlined_call_operand.hbm [shape: bf16[256,128], index: 7, kind: input, shape index: {}]
  %s8 = inlined_call_operand.vmem [shape: f32[1,128], index: 8, kind: input, shape index: {}]
  %s9 = inlined_call_operand.vmem [shape: f32[1,128], index: 9, kind: input, shape index: {}]
  %s10 = inlined_call_operand.vmem [shape: f32[1,128], index: 10, kind: input, shape index: {}]
  %s11 = inlined_call_operand.hbm [shape: bf16[16,128], index: 11, kind: output, shape index: {}]
  %s12 = sld [smem:[#allocation0]]
  $region74: #{tpu_custom_call.1} parent=0
    _
  %s14 = ssub.s32 1, %s12
  %s15 = scalar_select 0, %s14, %s12
  $region1: #{tpu_custom_call.1} parent=0
    #allocation2 [shape = 'u8[8192]{0}', space=vmem, size = 0x2000, scoped, tag = 'input window, operand 0, single buffered']
    #allocation3 [shape = 's32[1]{0}', space=sflag, size = 0x4, scoped, tag = 'scoped memory for tpu_custom_call.1']
    #allocation4 [shape = 's32[1]{0}', space=sflag, size = 0x4, scoped, tag = 'scoped memory for tpu_custom_call.1']
    #allocation5 [shape = 'u8[16384]{0}', space=vmem, size = 0x4000, scoped, tag = 'input window, operand 1, single buffered']
    #allocation6 [shape = 's32[1]{0}', space=sflag, size = 0x4, scoped, tag = 'scoped memory for tpu_custom_call.1']
    #allocation7 [shape = 'u8[131072]{0}', space=vmem, size = 0x20000, scoped, tag = 'input window, operand 3, single buffered']
    #allocation8 [shape = 'u8[131072]{0}', space=vmem, size = 0x20000, scoped, tag = 'input window, operand 5, single buffered']
    #allocation9 [shape = 's32[1]{0}', space=sflag, size = 0x4, scoped, tag = 'scoped memory for tpu_custom_call.1']
    #allocation10 [shape = 'u8[65536]{0}', space=vmem, size = 0x10000, scoped, tag = 'input window, operand 7, single buffered']
    #allocation11 [shape = 'u8[4096]{0}', space=vmem, size = 0x1000, scoped, tag = 'output window, operand 0, single buffered']
    %16 = vsyncpa [#allocation3], 0
    %17 = vsyncpa [#allocation6], 0
    %18 = vsyncpa [#allocation9], 0
    %19 = vsyncpa [#allocation4], 0
    // Predicated region
    $region2: #{tpu_custom_call.1} parent=1 // pred_check
      _
    $region3: #{tpu_custom_call.1} parent=1 // pred_check_branch
      %21 = sbr.rel (0) target = $region5
    $region4: #{tpu_custom_call.1} parent=1 // pred_region
      %s23 = ssub.s32 256, 256
      %24 = vsyncadd [#allocation3], %s23
      %s25 = sshll.u32 [#allocation2], 4
      %s26 = int_to_ptr.vmem [resolvable:$true] %s25
      %31 = dma.hbm_to_vmem [thread:$0]  %s0, 256, %s26, [#allocation3], 128, 128, 8
    $region5: #{tpu_custom_call.1} parent=1 // pred_fallthru
      _
    // Predicated region
    $region6: #{tpu_custom_call.1} parent=1 // pred_check
      _
    $region7: #{tpu_custom_call.1} parent=1 // pred_check_branch
      %33 = sbr.rel (0) target = $region9
    $region8: #{tpu_custom_call.1} parent=1 // pred_region
      %s35 = ssub.s32 512, 512
      %36 = vsyncadd [#allocation6], %s35
      %s37 = sshll.u32 [#allocation5], 4
      %s38 = int_to_ptr.vmem [resolvable:$true] %s37
      %43 = dma.hbm_to_vmem [thread:$0]  %s1, 512, %s38, [#allocation6], 128, 128, 8
    $region9: #{tpu_custom_call.1} parent=1 // pred_fallthru
      _
    // Predicated region
    $region10: #{tpu_custom_call.1} parent=1 // pred_check
      _
    $region11: #{tpu_custom_call.1} parent=1 // pred_check_branch
      %45 = sbr.rel (0) target = $region13
    $region12: #{tpu_custom_call.1} parent=1 // pred_region
      _
    $region13: #{tpu_custom_call.1} parent=1 // pred_fallthru
      _
    // Predicated region
    $region14: #{tpu_custom_call.1} parent=1 // pred_check
      _
    $region15: #{tpu_custom_call.1} parent=1 // pred_check_branch
      %47 = sbr.rel (0) target = $region17
    $region16: #{tpu_custom_call.1} parent=1 // pred_region
      %s49 = ssub.s32 4096, 4096
      %50 = vsyncadd [#allocation6], %s49
      %s51 = sshll.u32 [#allocation7], 4
      %s52 = int_to_ptr.vmem [resolvable:$true] %s51
      %57 = dma.hbm_to_vmem [thread:$0]  %s3, 4096, %s52, [#allocation6], 128, 128, 8
    $region17: #{tpu_custom_call.1} parent=1 // pred_fallthru
      _
    // Predicated region
    $region18: #{tpu_custom_call.1} parent=1 // pred_check
      _
    $region19: #{tpu_custom_call.1} parent=1 // pred_check_branch
      %59 = sbr.rel (0) target = $region21
    $region20: #{tpu_custom_call.1} parent=1 // pred_region
      _
    $region21: #{tpu_custom_call.1} parent=1 // pred_fallthru
      _
    // Predicated region
    $region22: #{tpu_custom_call.1} parent=1 // pred_check
      _
    $region23: #{tpu_custom_call.1} parent=1 // pred_check_branch
      %61 = sbr.rel (0) target = $region25
    $region24: #{tpu_custom_call.1} parent=1 // pred_region
      %s63 = ssub.s32 4096, 4096
      %64 = vsyncadd [#allocation9], %s63
      %s65 = sshll.u32 [#allocation8], 4
      %s66 = int_to_ptr.vmem [resolvable:$true] %s65
      %71 = dma.hbm_to_vmem [thread:$0]  %s5, 4096, %s66, [#allocation9], 128, 128, 8
    $region25: #{tpu_custom_call.1} parent=1 // pred_fallthru
      _
    // Predicated region
    $region26: #{tpu_custom_call.1} parent=1 // pred_check
      _
    $region27: #{tpu_custom_call.1} parent=1 // pred_check_branch
      %73 = sbr.rel (0) target = $region29
    $region28: #{tpu_custom_call.1} parent=1 // pred_region
      _
    $region29: #{tpu_custom_call.1} parent=1 // pred_fallthru
      _
    // Predicated region
    $region30: #{tpu_custom_call.1} parent=1 // pred_check
      _
    $region31: #{tpu_custom_call.1} parent=1 // pred_check_branch
      %75 = sbr.rel (0) target = $region33
    $region32: #{tpu_custom_call.1} parent=1 // pred_region
      %s77 = ssub.s32 2048, 2048
      %78 = vsyncadd [#allocation9], %s77
      %s79 = sshll.u32 [#allocation10], 4
      %s80 = int_to_ptr.vmem [resolvable:$true] %s79
      %85 = dma.hbm_to_vmem [thread:$0]  %s7, 2048, %s80, [#allocation9], 64, 64, 4
    $region33: #{tpu_custom_call.1} parent=1 // pred_fallthru
      _
    // Predicated region
    $region34: #{tpu_custom_call.1} parent=1 // pred_check
      _
    $region35: #{tpu_custom_call.1} parent=1 // pred_check_branch
      %87 = sbr.rel (0) target = $region37
    $region36: #{tpu_custom_call.1} parent=1 // pred_region
      _
    $region37: #{tpu_custom_call.1} parent=1 // pred_fallthru
      _
    // Predicated region
    $region38: #{tpu_custom_call.1} parent=1 // pred_check
      _
    $region39: #{tpu_custom_call.1} parent=1 // pred_check_branch
      %89 = sbr.rel (0) target = $region41
    $region40: #{tpu_custom_call.1} parent=1 // pred_region
      _
    $region41: #{tpu_custom_call.1} parent=1 // pred_fallthru
      _
    // Predicated region
    $region42: #{tpu_custom_call.1} parent=1 // pred_check
      _
    $region43: #{tpu_custom_call.1} parent=1 // pred_check_branch
      %91 = sbr.rel (0) target = $region45
    $region44: #{tpu_custom_call.1} parent=1 // pred_region
      _
    $region45: #{tpu_custom_call.1} parent=1 // pred_fallthru
      _
    // Predicated region
    $region46: #{tpu_custom_call.1} parent=1 // pred_check
      _
    $region47: #{tpu_custom_call.1} parent=1 // pred_check_branch
      %93 = sbr.rel (0) target = $region49
    $region48: #{tpu_custom_call.1} parent=1 // pred_region
      %94 = dma.done [#allocation3], 256
    $region49: #{tpu_custom_call.1} parent=1 // pred_fallthru
      _
    // Predicated region
    $region50: #{tpu_custom_call.1} parent=1 // pred_check
      _
    $region51: #{tpu_custom_call.1} parent=1 // pred_check_branch
      %96 = sbr.rel (0) target = $region53
    $region52: #{tpu_custom_call.1} parent=1 // pred_region
      %97 = dma.done [#allocation6], 512
    $region53: #{tpu_custom_call.1} parent=1 // pred_fallthru
      _
    // Predicated region
    $region54: #{tpu_custom_call.1} parent=1 // pred_check
      _
    $region55: #{tpu_custom_call.1} parent=1 // pred_check_branch
      %99 = sbr.rel (0) target = $region57
    $region56: #{tpu_custom_call.1} parent=1 // pred_region
      %100 = dma.done [#allocation6], 4096
    $region57: #{tpu_custom_call.1} parent=1 // pred_fallthru
      _
    // Predicated region
    $region58: #{tpu_custom_call.1} parent=1 // pred_check
      _
    $region59: #{tpu_custom_call.1} parent=1 // pred_check_branch
      %102 = sbr.rel (0) target = $region61
    $region60: #{tpu_custom_call.1} parent=1 // pred_region
      %103 = dma.done [#allocation9], 4096
    $region61: #{tpu_custom_call.1} parent=1 // pred_fallthru
      _
    // Predicated region
    $region62: #{tpu_custom_call.1} parent=1 // pred_check
      _
    $region63: #{tpu_custom_call.1} parent=1 // pred_check_branch
      %105 = sbr.rel (0) target = $region65
    $region64: #{tpu_custom_call.1} parent=1 // pred_region
      %106 = dma.done [#allocation9], 2048
    $region65: #{tpu_custom_call.1} parent=1 // pred_fallthru
      _
    %v108 = vld [vmem:[#allocation2] sm:$0xff]
    %v109 = vld [vmem:[#allocation2 + $0x8] sm:$0xff]
    %v110 = vpack.c.bf16 %v109, %v108
    %v111 = vld [vmem:[#allocation5] sm:$0xff]
    %v112 = vld [vmem:[#allocation5 + $0x8] sm:$0xff]
    %v113 = vld [vmem:[#allocation5 + $0x10] sm:$0xff]
    %v114 = vld [vmem:[#allocation5 + $0x18] sm:$0xff]
    %v115 = vld [vmem:[%s2] sm:$0x3]
    %v117 = vlaneseq
    %v118 = vshrl.u32 %v117, 7
    %v119 = vsub.s32 0, %v118
    %v120 = vrot.slane %v115, %v119
    %v121 = vlaneseq
    %v122 = vshrl.u32 %v121, 7
    %v123 = vsub.s32 1, %v122
    %v124 = vrot.slane %v115, %v123
    %v131 = vunpack.c.l.b16 %v111
    %v132 = vunpack.c.h.b16 %v111
    %v133 = vunpack.c.l.b16 %v112
    %v134 = vunpack.c.h.b16 %v112
    %v135 = vunpack.c.l.b16 %v113
    %v136 = vunpack.c.h.b16 %v113
    %v137 = vunpack.c.l.b16 %v114
    %v138 = vunpack.c.h.b16 %v114
    %v139 = vpack.c.b16 %v133, %v131
    %v140 = vpack.c.b16 %v134, %v132
    %v141 = vpack.c.b16 %v137, %v135
    %v142 = vpack.c.b16 %v138, %v136
    %vm147 = vcmask 261120
    %v149 = vsel %vm147, %v110, 0
    %151 = vmatprep.subr.bf16.mxu0 %v140
    %152 = vmatpush1.bf16.msra.mxu0 %v139
    %153 = vmatprep.subr.bf16.mxu0 %v142
    %154 = vmatpush1.bf16.msra.mxu0 %v141
    %155 = vmatprep.subr.bf16.mxu0 0
    %156 = vmatpush1.bf16.msra.mxu0 0
    %157 = vmatprep.subr.bf16.mxu0 0
    %158 = vmatpush1.bf16.msra.mxu0 0
    %159 = vmatprep.subr.bf16.mxu0 0
    %160 = vmatpush1.bf16.msra.mxu0 0
    %161 = vmatprep.subr.bf16.mxu0 0
    %162 = vmatpush1.bf16.msra.mxu0 0
    %163 = vmatprep.subr.bf16.mxu0 0
    %164 = vmatpush1.bf16.msra.mxu0 0
    %165 = vmatprep.subr.bf16.mxu0 0
    %166 = vmatpush1.bf16.msra.mxu0 0
    %167 = vmatprep.subr.bf16.mxu0 0
    %168 = vmatpush1.bf16.msra.mxu0 0
    %169 = vmatprep.subr.bf16.mxu0 0
    %170 = vmatpush1.bf16.msra.mxu0 0
    %171 = vmatprep.subr.bf16.mxu0 0
    %172 = vmatpush1.bf16.msra.mxu0 0
    %173 = vmatprep.subr.bf16.mxu0 0
    %174 = vmatpush1.bf16.msra.mxu0 0
    %175 = vmatprep.subr.bf16.mxu0 0
    %176 = vmatpush1.bf16.msra.mxu0 0
    %177 = vmatprep.subr.bf16.mxu0 0
    %178 = vmatpush1.bf16.msra.mxu0 0
    %179 = vmatprep.subr.bf16.mxu0 0
    %180 = vmatpush1.bf16.msra.mxu0 0
    %181 = vmatprep.subr.bf16.mxu0 0
    %182 = vmatpush1.bf16.msra.mxu0 0
    %183 = vmatprep.mubr.bf16.mxu0 0
    %184 = vmatmul.mubr.bf16.gmra.mrb[0].mxu0 %v149
    %v185 = vpop.f32.mrb[0].mxu0
    %v186 = vadd.f32 %v120, %v185
    %v187 = vpop.f32.mrb[0].mxu0
    %v188 = vadd.f32 %v124, %v187
    %v189 = vpop.f32.mrb[0].mxu0
    %v190 = vadd.f32 %v120, %v189
    %v191 = vpop.f32.mrb[0].mxu0
    %v192 = vadd.f32 %v124, %v191
    %193 = vdwg.mxu0
    %v194 = vmax.f32 %v186, 0.0
    %v195 = vmax.f32 %v188, 0.0
    %v196 = vmax.f32 %v190, 0.0
    %v197 = vmax.f32 %v192, 0.0
    %v198 = vpack.c.bf16 %v196, %v194
    %v199 = vpack.c.bf16 %v197, %v195
    %v200 = vld [vmem:[#allocation7] sm:$0xff]
    %v201 = vld [vmem:[#allocation7 + $0x8] sm:$0xff]
    %v202 = vld [vmem:[#allocation7 + $0x10] sm:$0xff]
    %v203 = vld [vmem:[#allocation7 + $0x18] sm:$0xff]
    %v204 = vld [vmem:[#allocation7 + $0x20] sm:$0xff]
    %v205 = vld [vmem:[#allocation7 + $0x28] sm:$0xff]
    %v206 = vld [vmem:[#allocation7 + $0x30] sm:$0xff]
    %v207 = vld [vmem:[#allocation7 + $0x38] sm:$0xff]
    %v208 = vld [vmem:[#allocation7 + $0x40] sm:$0xff]
    %v209 = vld [vmem:[#allocation7 + $0x48] sm:$0xff]
    %v210 = vld [vmem:[#allocation7 + $0x50] sm:$0xff]
    %v211 = vld [vmem:[#allocation7 + $0x58] sm:$0xff]
    %v212 = vld [vmem:[#allocation7 + $0x60] sm:$0xff]
    %v213 = vld [vmem:[#allocation7 + $0x68] sm:$0xff]
    %v214 = vld [vmem:[#allocation7 + $0x70] sm:$0xff]
    %v215 = vld [vmem:[#allocation7 + $0x78] sm:$0xff]
    %v216 = vld [vmem:[#allocation7 + $0x80] sm:$0xff]
    %v217 = vld [vmem:[#allocation7 + $0x88] sm:$0xff]
    %v218 = vld [vmem:[#allocation7 + $0x90] sm:$0xff]
    %v219 = vld [vmem:[#allocation7 + $0x98] sm:$0xff]
    %v220 = vld [vmem:[#allocation7 + $0xa0] sm:$0xff]
    %v221 = vld [vmem:[#allocation7 + $0xa8] sm:$0xff]
    %v222 = vld [vmem:[#allocation7 + $0xb0] sm:$0xff]
    %v223 = vld [vmem:[#allocation7 + $0xb8] sm:$0xff]
    %v224 = vld [vmem:[#allocation7 + $0xc0] sm:$0xff]
    %v225 = vld [vmem:[#allocation7 + $0xc8] sm:$0xff]
    %v226 = vld [vmem:[#allocation7 + $0xd0] sm:$0xff]
    %v227 = vld [vmem:[#allocation7 + $0xd8] sm:$0xff]
    %v228 = vld [vmem:[#allocation7 + $0xe0] sm:$0xff]
    %v229 = vld [vmem:[#allocation7 + $0xe8] sm:$0xff]
    %v230 = vld [vmem:[#allocation7 + $0xf0] sm:$0xff]
    %v231 = vld [vmem:[#allocation7 + $0xf8] sm:$0xff]
    %v232 = vld [vmem:[%s4] sm:$0x3]
    %v234 = vlaneseq
    %v235 = vshrl.u32 %v234, 7
    %v236 = vsub.s32 0, %v235
    %v237 = vrot.slane %v232, %v236
    %v238 = vlaneseq
    %v239 = vshrl.u32 %v238, 7
    %v240 = vsub.s32 1, %v239
    %v241 = vrot.slane %v232, %v240
    %v276 = vunpack.c.l.b16 %v200
    %v277 = vunpack.c.h.b16 %v200
    %v278 = vunpack.c.l.b16 %v201
    %v279 = vunpack.c.h.b16 %v201
    %v280 = vunpack.c.l.b16 %v202
    %v281 = vunpack.c.h.b16 %v202
    %v282 = vunpack.c.l.b16 %v203
    %v283 = vunpack.c.h.b16 %v203
    %v284 = vunpack.c.l.b16 %v204
    %v285 = vunpack.c.h.b16 %v204
    %v286 = vunpack.c.l.b16 %v205
    %v287 = vunpack.c.h.b16 %v205
    %v288 = vunpack.c.l.b16 %v206
    %v289 = vunpack.c.h.b16 %v206
    %v290 = vunpack.c.l.b16 %v207
    %v291 = vunpack.c.h.b16 %v207
    %v292 = vunpack.c.l.b16 %v208
    %v293 = vunpack.c.h.b16 %v208
    %v294 = vunpack.c.l.b16 %v209
    %v295 = vunpack.c.h.b16 %v209
    %v296 = vunpack.c.l.b16 %v210
    %v297 = vunpack.c.h.b16 %v210
    %v298 = vunpack.c.l.b16 %v211
    %v299 = vunpack.c.h.b16 %v211
    %v300 = vunpack.c.l.b16 %v212
    %v301 = vunpack.c.h.b16 %v212
    %v302 = vunpack.c.l.b16 %v213
    %v303 = vunpack.c.h.b16 %v213
    %v304 = vunpack.c.l.b16 %v214
    %v305 = vunpack.c.h.b16 %v214
    %v306 = vunpack.c.l.b16 %v215
    %v307 = vunpack.c.h.b16 %v215
    %v308 = vunpack.c.l.b16 %v216
    %v309 = vunpack.c.h.b16 %v216
    %v310 = vunpack.c.l.b16 %v217
    %v311 = vunpack.c.h.b16 %v217
    %v312 = vunpack.c.l.b16 %v218
    %v313 = vunpack.c.h.b16 %v218
    %v314 = vunpack.c.l.b16 %v219
    %v315 = vunpack.c.h.b16 %v219
    %v316 = vunpack.c.l.b16 %v220
    %v317 = vunpack.c.h.b16 %v220
    %v318 = vunpack.c.l.b16 %v221
    %v319 = vunpack.c.h.b16 %v221
    %v320 = vunpack.c.l.b16 %v222
    %v321 = vunpack.c.h.b16 %v222
    %v322 = vunpack.c.l.b16 %v223
    %v323 = vunpack.c.h.b16 %v223
    %v324 = vunpack.c.l.b16 %v224
    %v325 = vunpack.c.h.b16 %v224
    %v326 = vunpack.c.l.b16 %v225
    %v327 = vunpack.c.h.b16 %v225
    %v328 = vunpack.c.l.b16 %v226
    %v329 = vunpack.c.h.b16 %v226
    %v330 = vunpack.c.l.b16 %v227
    %v331 = vunpack.c.h.b16 %v227
    %v332 = vunpack.c.l.b16 %v228
    %v333 = vunpack.c.h.b16 %v228
    %v334 = vunpack.c.l.b16 %v229
    %v335 = vunpack.c.h.b16 %v229
    %v336 = vunpack.c.l.b16 %v230
    %v337 = vunpack.c.h.b16 %v230
    %v338 = vunpack.c.l.b16 %v231
    %v339 = vunpack.c.h.b16 %v231
    %v340 = vpack.c.b16 %v278, %v276
    %v341 = vpack.c.b16 %v279, %v277
    %v342 = vpack.c.b16 %v282, %v280
    %v343 = vpack.c.b16 %v283, %v281
    %v344 = vpack.c.b16 %v286, %v284
    %v345 = vpack.c.b16 %v287, %v285
    %v346 = vpack.c.b16 %v290, %v288
    %v347 = vpack.c.b16 %v291, %v289
    %v348 = vpack.c.b16 %v294, %v292
    %v349 = vpack.c.b16 %v295, %v293
    %v350 = vpack.c.b16 %v298, %v296
    %v351 = vpack.c.b16 %v299, %v297
    %v352 = vpack.c.b16 %v302, %v300
    %v353 = vpack.c.b16 %v303, %v301
    %v354 = vpack.c.b16 %v306, %v304
    %v355 = vpack.c.b16 %v307, %v305
    %v356 = vpack.c.b16 %v310, %v308
    %v357 = vpack.c.b16 %v311, %v309
    %v358 = vpack.c.b16 %v314, %v312
    %v359 = vpack.c.b16 %v315, %v313
    %v360 = vpack.c.b16 %v318, %v316
    %v361 = vpack.c.b16 %v319, %v317
    %v362 = vpack.c.b16 %v322, %v320
    %v363 = vpack.c.b16 %v323, %v321
    %v364 = vpack.c.b16 %v326, %v324
    %v365 = vpack.c.b16 %v327, %v325
    %v366 = vpack.c.b16 %v330, %v328
    %v367 = vpack.c.b16 %v331, %v329
    %v368 = vpack.c.b16 %v334, %v332
    %v369 = vpack.c.b16 %v335, %v333
    %v370 = vpack.c.b16 %v338, %v336
    %v371 = vpack.c.b16 %v339, %v337
    %404 = vmatprep.subr.bf16.mxu0 %v341
    %405 = vmatpush1.bf16.msra.mxu0 %v340
    %406 = vmatprep.subr.bf16.mxu0 %v343
    %407 = vmatpush1.bf16.msra.mxu0 %v342
    %408 = vmatprep.subr.bf16.mxu0 %v345
    %409 = vmatpush1.bf16.msra.mxu0 %v344
    %410 = vmatprep.subr.bf16.mxu0 %v347
    %411 = vmatpush1.bf16.msra.mxu0 %v346
    %412 = vmatprep.subr.bf16.mxu0 %v349
    %413 = vmatpush1.bf16.msra.mxu0 %v348
    %414 = vmatprep.subr.bf16.mxu0 %v351
    %415 = vmatpush1.bf16.msra.mxu0 %v350
    %416 = vmatprep.subr.bf16.mxu0 %v353
    %417 = vmatpush1.bf16.msra.mxu0 %v352
    %418 = vmatprep.subr.bf16.mxu0 %v355
    %419 = vmatpush1.bf16.msra.mxu0 %v354
    %420 = vmatprep.subr.bf16.mxu0 %v357
    %421 = vmatpush1.bf16.msra.mxu0 %v356
    %422 = vmatprep.subr.bf16.mxu0 %v359
    %423 = vmatpush1.bf16.msra.mxu0 %v358
    %424 = vmatprep.subr.bf16.mxu0 %v361
    %425 = vmatpush1.bf16.msra.mxu0 %v360
    %426 = vmatprep.subr.bf16.mxu0 %v363
    %427 = vmatpush1.bf16.msra.mxu0 %v362
    %428 = vmatprep.subr.bf16.mxu0 %v365
    %429 = vmatpush1.bf16.msra.mxu0 %v364
    %430 = vmatprep.subr.bf16.mxu0 %v367
    %431 = vmatpush1.bf16.msra.mxu0 %v366
    %432 = vmatprep.subr.bf16.mxu0 %v369
    %433 = vmatpush1.bf16.msra.mxu0 %v368
    %434 = vmatprep.subr.bf16.mxu0 %v371
    %435 = vmatpush1.bf16.msra.mxu0 %v370
    %436 = vmatprep.mubr.bf16.mxu0 %v199
    %437 = vmatmul.mubr.bf16.gmra.mrb[0].mxu0 %v198
    %v438 = vpop.f32.mrb[0].mxu0
    %v439 = vadd.f32 %v237, %v438
    %v440 = vpop.f32.mrb[0].mxu0
    %v441 = vadd.f32 %v241, %v440
    %v442 = vpop.f32.mrb[0].mxu0
    %v443 = vadd.f32 %v237, %v442
    %v444 = vpop.f32.mrb[0].mxu0
    %v445 = vadd.f32 %v241, %v444
    %446 = vdwg.mxu0
    %v447 = vmax.f32 %v439, 0.0
    %v448 = vmax.f32 %v441, 0.0
    %v449 = vmax.f32 %v443, 0.0
    %v450 = vmax.f32 %v445, 0.0
    %v451 = vpack.c.bf16 %v449, %v447
    %v452 = vpack.c.bf16 %v450, %v448
    %v453 = vld [vmem:[#allocation8] sm:$0xff]
    %v454 = vld [vmem:[#allocation8 + $0x8] sm:$0xff]
    %v455 = vld [vmem:[#allocation8 + $0x10] sm:$0xff]
    %v456 = vld [vmem:[#allocation8 + $0x18] sm:$0xff]
    %v457 = vld [vmem:[#allocation8 + $0x20] sm:$0xff]
    %v458 = vld [vmem:[#allocation8 + $0x28] sm:$0xff]
    %v459 = vld [vmem:[#allocation8 + $0x30] sm:$0xff]
    %v460 = vld [vmem:[#allocation8 + $0x38] sm:$0xff]
    %v461 = vld [vmem:[#allocation8 + $0x40] sm:$0xff]
    %v462 = vld [vmem:[#allocation8 + $0x48] sm:$0xff]
    %v463 = vld [vmem:[#allocation8 + $0x50] sm:$0xff]
    %v464 = vld [vmem:[#allocation8 + $0x58] sm:$0xff]
    %v465 = vld [vmem:[#allocation8 + $0x60] sm:$0xff]
    %v466 = vld [vmem:[#allocation8 + $0x68] sm:$0xff]
    %v467 = vld [vmem:[#allocation8 + $0x70] sm:$0xff]
    %v468 = vld [vmem:[#allocation8 + $0x78] sm:$0xff]
    %v469 = vld [vmem:[#allocation8 + $0x80] sm:$0xff]
    %v470 = vld [vmem:[#allocation8 + $0x88] sm:$0xff]
    %v471 = vld [vmem:[#allocation8 + $0x90] sm:$0xff]
    %v472 = vld [vmem:[#allocation8 + $0x98] sm:$0xff]
    %v473 = vld [vmem:[#allocation8 + $0xa0] sm:$0xff]
    %v474 = vld [vmem:[#allocation8 + $0xa8] sm:$0xff]
    %v475 = vld [vmem:[#allocation8 + $0xb0] sm:$0xff]
    %v476 = vld [vmem:[#allocation8 + $0xb8] sm:$0xff]
    %v477 = vld [vmem:[#allocation8 + $0xc0] sm:$0xff]
    %v478 = vld [vmem:[#allocation8 + $0xc8] sm:$0xff]
    %v479 = vld [vmem:[#allocation8 + $0xd0] sm:$0xff]
    %v480 = vld [vmem:[#allocation8 + $0xd8] sm:$0xff]
    %v481 = vld [vmem:[#allocation8 + $0xe0] sm:$0xff]
    %v482 = vld [vmem:[#allocation8 + $0xe8] sm:$0xff]
    %v483 = vld [vmem:[#allocation8 + $0xf0] sm:$0xff]
    %v484 = vld [vmem:[#allocation8 + $0xf8] sm:$0xff]
    %v485 = vld [vmem:[%s6] sm:$0x3]
    %v487 = vlaneseq
    %v488 = vshrl.u32 %v487, 7
    %v489 = vsub.s32 0, %v488
    %v490 = vrot.slane %v485, %v489
    %v491 = vlaneseq
    %v492 = vshrl.u32 %v491, 7
    %v493 = vsub.s32 1, %v492
    %v494 = vrot.slane %v485, %v493
    %v529 = vunpack.c.l.b16 %v453
    %v530 = vunpack.c.h.b16 %v453
    %v531 = vunpack.c.l.b16 %v454
    %v532 = vunpack.c.h.b16 %v454
    %v533 = vunpack.c.l.b16 %v455
    %v534 = vunpack.c.h.b16 %v455
    %v535 = vunpack.c.l.b16 %v456
    %v536 = vunpack.c.h.b16 %v456
    %v537 = vunpack.c.l.b16 %v457
    %v538 = vunpack.c.h.b16 %v457
    %v539 = vunpack.c.l.b16 %v458
    %v540 = vunpack.c.h.b16 %v458
    %v541 = vunpack.c.l.b16 %v459
    %v542 = vunpack.c.h.b16 %v459
    %v543 = vunpack.c.l.b16 %v460
    %v544 = vunpack.c.h.b16 %v460
    %v545 = vunpack.c.l.b16 %v461
    %v546 = vunpack.c.h.b16 %v461
    %v547 = vunpack.c.l.b16 %v462
    %v548 = vunpack.c.h.b16 %v462
    %v549 = vunpack.c.l.b16 %v463
    %v550 = vunpack.c.h.b16 %v463
    %v551 = vunpack.c.l.b16 %v464
    %v552 = vunpack.c.h.b16 %v464
    %v553 = vunpack.c.l.b16 %v465
    %v554 = vunpack.c.h.b16 %v465
    %v555 = vunpack.c.l.b16 %v466
    %v556 = vunpack.c.h.b16 %v466
    %v557 = vunpack.c.l.b16 %v467
    %v558 = vunpack.c.h.b16 %v467
    %v559 = vunpack.c.l.b16 %v468
    %v560 = vunpack.c.h.b16 %v468
    %v561 = vunpack.c.l.b16 %v469
    %v562 = vunpack.c.h.b16 %v469
    %v563 = vunpack.c.l.b16 %v470
    %v564 = vunpack.c.h.b16 %v470
    %v565 = vunpack.c.l.b16 %v471
    %v566 = vunpack.c.h.b16 %v471
    %v567 = vunpack.c.l.b16 %v472
    %v568 = vunpack.c.h.b16 %v472
    %v569 = vunpack.c.l.b16 %v473
    %v570 = vunpack.c.h.b16 %v473
    %v571 = vunpack.c.l.b16 %v474
    %v572 = vunpack.c.h.b16 %v474
    %v573 = vunpack.c.l.b16 %v475
    %v574 = vunpack.c.h.b16 %v475
    %v575 = vunpack.c.l.b16 %v476
    %v576 = vunpack.c.h.b16 %v476
    %v577 = vunpack.c.l.b16 %v477
    %v578 = vunpack.c.h.b16 %v477
    %v579 = vunpack.c.l.b16 %v478
    %v580 = vunpack.c.h.b16 %v478
    %v581 = vunpack.c.l.b16 %v479
    %v582 = vunpack.c.h.b16 %v479
    %v583 = vunpack.c.l.b16 %v480
    %v584 = vunpack.c.h.b16 %v480
    %v585 = vunpack.c.l.b16 %v481
    %v586 = vunpack.c.h.b16 %v481
    %v587 = vunpack.c.l.b16 %v482
    %v588 = vunpack.c.h.b16 %v482
    %v589 = vunpack.c.l.b16 %v483
    %v590 = vunpack.c.h.b16 %v483
    %v591 = vunpack.c.l.b16 %v484
    %v592 = vunpack.c.h.b16 %v484
    %v593 = vpack.c.b16 %v531, %v529
    %v594 = vpack.c.b16 %v532, %v530
    %v595 = vpack.c.b16 %v535, %v533
    %v596 = vpack.c.b16 %v536, %v534
    %v597 = vpack.c.b16 %v539, %v537
    %v598 = vpack.c.b16 %v540, %v538
    %v599 = vpack.c.b16 %v543, %v541
    %v600 = vpack.c.b16 %v544, %v542
    %v601 = vpack.c.b16 %v547, %v545
    %v602 = vpack.c.b16 %v548, %v546
    %v603 = vpack.c.b16 %v551, %v549
    %v604 = vpack.c.b16 %v552, %v550
    %v605 = vpack.c.b16 %v555, %v553
    %v606 = vpack.c.b16 %v556, %v554
    %v607 = vpack.c.b16 %v559, %v557
    %v608 = vpack.c.b16 %v560, %v558
    %v609 = vpack.c.b16 %v563, %v561
    %v610 = vpack.c.b16 %v564, %v562
    %v611 = vpack.c.b16 %v567, %v565
    %v612 = vpack.c.b16 %v568, %v566
    %v613 = vpack.c.b16 %v571, %v569
    %v614 = vpack.c.b16 %v572, %v570
    %v615 = vpack.c.b16 %v575, %v573
    %v616 = vpack.c.b16 %v576, %v574
    %v617 = vpack.c.b16 %v579, %v577
    %v618 = vpack.c.b16 %v580, %v578
    %v619 = vpack.c.b16 %v583, %v581
    %v620 = vpack.c.b16 %v584, %v582
    %v621 = vpack.c.b16 %v587, %v585
    %v622 = vpack.c.b16 %v588, %v586
    %v623 = vpack.c.b16 %v591, %v589
    %v624 = vpack.c.b16 %v592, %v590
    %657 = vmatprep.subr.bf16.mxu0 %v594
    %658 = vmatpush1.bf16.msra.mxu0 %v593
    %659 = vmatprep.subr.bf16.mxu0 %v596
    %660 = vmatpush1.bf16.msra.mxu0 %v595
    %661 = vmatprep.subr.bf16.mxu0 %v598
    %662 = vmatpush1.bf16.msra.mxu0 %v597
    %663 = vmatprep.subr.bf16.mxu0 %v600
    %664 = vmatpush1.bf16.msra.mxu0 %v599
    %665 = vmatprep.subr.bf16.mxu0 %v602
    %666 = vmatpush1.bf16.msra.mxu0 %v601
    %667 = vmatprep.subr.bf16.mxu0 %v604
    %668 = vmatpush1.bf16.msra.mxu0 %v603
    %669 = vmatprep.subr.bf16.mxu0 %v606
    %670 = vmatpush1.bf16.msra.mxu0 %v605
    %671 = vmatprep.subr.bf16.mxu0 %v608
    %672 = vmatpush1.bf16.msra.mxu0 %v607
    %673 = vmatprep.subr.bf16.mxu0 %v610
    %674 = vmatpush1.bf16.msra.mxu0 %v609
    %675 = vmatprep.subr.bf16.mxu0 %v612
    %676 = vmatpush1.bf16.msra.mxu0 %v611
    %677 = vmatprep.subr.bf16.mxu0 %v614
    %678 = vmatpush1.bf16.msra.mxu0 %v613
    %679 = vmatprep.subr.bf16.mxu0 %v616
    %680 = vmatpush1.bf16.msra.mxu0 %v615
    %681 = vmatprep.subr.bf16.mxu0 %v618
    %682 = vmatpush1.bf16.msra.mxu0 %v617
    %683 = vmatprep.subr.bf16.mxu0 %v620
    %684 = vmatpush1.bf16.msra.mxu0 %v619
    %685 = vmatprep.subr.bf16.mxu0 %v622
    %686 = vmatpush1.bf16.msra.mxu0 %v621
    %687 = vmatprep.subr.bf16.mxu0 %v624
    %688 = vmatpush1.bf16.msra.mxu0 %v623
    %689 = vmatprep.mubr.bf16.mxu0 %v452
    %690 = vmatmul.mubr.bf16.gmra.mrb[0].mxu0 %v451
    %v691 = vpop.f32.mrb[0].mxu0
    %v692 = vadd.f32 %v490, %v691
    %v693 = vpop.f32.mrb[0].mxu0
    %v694 = vadd.f32 %v494, %v693
    %v695 = vpop.f32.mrb[0].mxu0
    %v696 = vadd.f32 %v490, %v695
    %v697 = vpop.f32.mrb[0].mxu0
    %v698 = vadd.f32 %v494, %v697
    %699 = vdwg.mxu0
    %v700 = vmax.f32 %v692, 0.0
    %v701 = vmax.f32 %v694, 0.0
    %v702 = vmax.f32 %v696, 0.0
    %v703 = vmax.f32 %v698, 0.0
    %v704 = vpack.c.bf16 %v702, %v700
    %v705 = vpack.c.bf16 %v703, %v701
    %v706 = vld [vmem:[#allocation10] sm:$0xf]
    %v707 = vld [vmem:[#allocation10 + $0x4] sm:$0xf]
    %v708 = vld [vmem:[#allocation10 + $0x8] sm:$0xf]
    %v709 = vld [vmem:[#allocation10 + $0xc] sm:$0xf]
    %v710 = vld [vmem:[#allocation10 + $0x10] sm:$0xf]
    %v711 = vld [vmem:[#allocation10 + $0x14] sm:$0xf]
    %v712 = vld [vmem:[#allocation10 + $0x18] sm:$0xf]
    %v713 = vld [vmem:[#allocation10 + $0x1c] sm:$0xf]
    %v714 = vld [vmem:[#allocation10 + $0x20] sm:$0xf]
    %v715 = vld [vmem:[#allocation10 + $0x24] sm:$0xf]
    %v716 = vld [vmem:[#allocation10 + $0x28] sm:$0xf]
    %v717 = vld [vmem:[#allocation10 + $0x2c] sm:$0xf]
    %v718 = vld [vmem:[#allocation10 + $0x30] sm:$0xf]
    %v719 = vld [vmem:[#allocation10 + $0x34] sm:$0xf]
    %v720 = vld [vmem:[#allocation10 + $0x38] sm:$0xf]
    %v721 = vld [vmem:[#allocation10 + $0x3c] sm:$0xf]
    %v722 = vld [vmem:[#allocation10 + $0x40] sm:$0xf]
    %v723 = vld [vmem:[#allocation10 + $0x44] sm:$0xf]
    %v724 = vld [vmem:[#allocation10 + $0x48] sm:$0xf]
    %v725 = vld [vmem:[#allocation10 + $0x4c] sm:$0xf]
    %v726 = vld [vmem:[#allocation10 + $0x50] sm:$0xf]
    %v727 = vld [vmem:[#allocation10 + $0x54] sm:$0xf]
    %v728 = vld [vmem:[#allocation10 + $0x58] sm:$0xf]
    %v729 = vld [vmem:[#allocation10 + $0x5c] sm:$0xf]
    %v730 = vld [vmem:[#allocation10 + $0x60] sm:$0xf]
    %v731 = vld [vmem:[#allocation10 + $0x64] sm:$0xf]
    %v732 = vld [vmem:[#allocation10 + $0x68] sm:$0xf]
    %v733 = vld [vmem:[#allocation10 + $0x6c] sm:$0xf]
    %v734 = vld [vmem:[#allocation10 + $0x70] sm:$0xf]
    %v735 = vld [vmem:[#allocation10 + $0x74] sm:$0xf]
    %v736 = vld [vmem:[#allocation10 + $0x78] sm:$0xf]
    %v737 = vld [vmem:[#allocation10 + $0x7c] sm:$0xf]
    %v738 = vld [vmem:[%s8] sm:$0x1]
    %v740 = vlaneseq
    %v741 = vshrl.u32 %v740, 7
    %v742 = vsub.s32 0, %v741
    %v743 = vrot.slane %v738, %v742
    %v777 = vunpack.c.l.b16 %v706
    %v778 = vunpack.c.l.b16 %v707
    %v779 = vunpack.c.l.b16 %v708
    %v780 = vunpack.c.l.b16 %v709
    %v781 = vunpack.c.l.b16 %v710
    %v782 = vunpack.c.l.b16 %v711
    %v783 = vunpack.c.l.b16 %v712
    %v784 = vunpack.c.l.b16 %v713
    %v785 = vunpack.c.l.b16 %v714
    %v786 = vunpack.c.l.b16 %v715
    %v787 = vunpack.c.l.b16 %v716
    %v788 = vunpack.c.l.b16 %v717
    %v789 = vunpack.c.l.b16 %v718
    %v790 = vunpack.c.l.b16 %v719
    %v791 = vunpack.c.l.b16 %v720
    %v792 = vunpack.c.l.b16 %v721
    %v793 = vunpack.c.l.b16 %v722
    %v794 = vunpack.c.l.b16 %v723
    %v795 = vunpack.c.l.b16 %v724
    %v796 = vunpack.c.l.b16 %v725
    %v797 = vunpack.c.l.b16 %v726
    %v798 = vunpack.c.l.b16 %v727
    %v799 = vunpack.c.l.b16 %v728
    %v800 = vunpack.c.l.b16 %v729
    %v801 = vunpack.c.l.b16 %v730
    %v802 = vunpack.c.l.b16 %v731
    %v803 = vunpack.c.l.b16 %v732
    %v804 = vunpack.c.l.b16 %v733
    %v805 = vunpack.c.l.b16 %v734
    %v806 = vunpack.c.l.b16 %v735
    %v807 = vunpack.c.l.b16 %v736
    %v808 = vunpack.c.l.b16 %v737
    %v809 = vpack.c.b16 %v778, %v777
    %v810 = vpack.c.b16 %v780, %v779
    %v811 = vpack.c.b16 %v782, %v781
    %v812 = vpack.c.b16 %v784, %v783
    %v813 = vpack.c.b16 %v786, %v785
    %v814 = vpack.c.b16 %v788, %v787
    %v815 = vpack.c.b16 %v790, %v789
    %v816 = vpack.c.b16 %v792, %v791
    %v817 = vpack.c.b16 %v794, %v793
    %v818 = vpack.c.b16 %v796, %v795
    %v819 = vpack.c.b16 %v798, %v797
    %v820 = vpack.c.b16 %v800, %v799
    %v821 = vpack.c.b16 %v802, %v801
    %v822 = vpack.c.b16 %v804, %v803
    %v823 = vpack.c.b16 %v806, %v805
    %v824 = vpack.c.b16 %v808, %v807
    %841 = vmatprep.subr.bf16.mxu0 0
    %842 = vmatpush1.bf16.msra.mxu0 %v809
    %843 = vmatprep.subr.bf16.mxu0 0
    %844 = vmatpush1.bf16.msra.mxu0 %v810
    %845 = vmatprep.subr.bf16.mxu0 0
    %846 = vmatpush1.bf16.msra.mxu0 %v811
    %847 = vmatprep.subr.bf16.mxu0 0
    %848 = vmatpush1.bf16.msra.mxu0 %v812
    %849 = vmatprep.subr.bf16.mxu0 0
    %850 = vmatpush1.bf16.msra.mxu0 %v813
    %851 = vmatprep.subr.bf16.mxu0 0
    %852 = vmatpush1.bf16.msra.mxu0 %v814
    %853 = vmatprep.subr.bf16.mxu0 0
    %854 = vmatpush1.bf16.msra.mxu0 %v815
    %855 = vmatprep.subr.bf16.mxu0 0
    %856 = vmatpush1.bf16.msra.mxu0 %v816
    %857 = vmatprep.subr.bf16.mxu0 0
    %858 = vmatpush1.bf16.msra.mxu0 %v817
    %859 = vmatprep.subr.bf16.mxu0 0
    %860 = vmatpush1.bf16.msra.mxu0 %v818
    %861 = vmatprep.subr.bf16.mxu0 0
    %862 = vmatpush1.bf16.msra.mxu0 %v819
    %863 = vmatprep.subr.bf16.mxu0 0
    %864 = vmatpush1.bf16.msra.mxu0 %v820
    %865 = vmatprep.subr.bf16.mxu0 0
    %866 = vmatpush1.bf16.msra.mxu0 %v821
    %867 = vmatprep.subr.bf16.mxu0 0
    %868 = vmatpush1.bf16.msra.mxu0 %v822
    %869 = vmatprep.subr.bf16.mxu0 0
    %870 = vmatpush1.bf16.msra.mxu0 %v823
    %871 = vmatprep.subr.bf16.mxu0 0
    %872 = vmatpush1.bf16.msra.mxu0 %v824
    %873 = vmatprep.mubr.bf16.mxu0 %v705
    %874 = vmatmul.mubr.bf16.gmra.mrb[0].mxu0 %v704
    %v875 = vpop.f32.mrb[0].mxu0
    %v876 = vadd.f32 %v743, %v875
    %v877 = vpop.f32.mrb[0].mxu0
    %v878 = vpop.f32.mrb[0].mxu0
    %v879 = vadd.f32 %v743, %v878
    %v880 = vpop.f32.mrb[0].mxu0
    %881 = vdwg.mxu0
    %v882 = vld [vmem:[%s9] sm:$0x1]
    %v884 = vlaneseq
    %v885 = vshrl.u32 %v884, 7
    %v886 = vsub.s32 0, %v885
    %v887 = vrot.slane %v882, %v886
    %v889 = vmax.f32 %v876, %v887
    %v890 = vmax.f32 %v879, %v887
    %v891 = vld [vmem:[%s10] sm:$0x1]
    %v893 = vlaneseq
    %v894 = vshrl.u32 %v893, 7
    %v895 = vsub.s32 0, %v894
    %v896 = vrot.slane %v891, %v895
    %v898 = vmin.f32 %v889, %v896
    %v899 = vmin.f32 %v890, %v896
    %v900 = vpack.c.bf16 %v899, %v898
    %v902 = vunpack.c.l.b16 %v900
    %v903 = vunpack.c.h.b16 %v900
    %v904 = vpack.c.b16 %v902, %v902
    %v905 = vpack.c.b16 %v903, %v903
    %908 = vst [vmem:[#allocation11] sm:$0xf] %v904
    %909 = vst [vmem:[#allocation11 + $0x4] sm:$0xf] %v905
    // Predicated region
    $region66: #{tpu_custom_call.1} parent=1 // pred_check
      _
    $region67: #{tpu_custom_call.1} parent=1 // pred_check_branch
      %911 = sbr.rel (0) target = $region69
    $region68: #{tpu_custom_call.1} parent=1 // pred_region
      %s913 = ssub.s32 128, 128
      %914 = vsyncadd [#allocation4], %s913
      %s915 = sshll.u32 [#allocation11], 4
      %s916 = int_to_ptr.vmem [resolvable:$true] %s915
      %921 = dma.vmem_to_hbm [thread:$0]  %s916, 128, %s11, [#allocation4], 64, 64, 4
    $region69: #{tpu_custom_call.1} parent=1 // pred_fallthru
      _
    // Predicated region
    $region70: #{tpu_custom_call.1} parent=1 // pred_check
      _
    $region71: #{tpu_custom_call.1} parent=1 // pred_check_branch
      %923 = sbr.rel (0) target = $region73
    $region72: #{tpu_custom_call.1} parent=1 // pred_region
      %924 = dma.done [#allocation4], 128
    $region73: #{tpu_custom_call.1} parent=1 // pred_fallthru
      _
    %925 = vsyncpa [#allocation3], 1
    %926 = vsyncpa [#allocation6], 1
    %927 = vsyncpa [#allocation9], 1
    %928 = vsyncpa [#allocation4], 1

</llo_original>
